<compile_context>
chip_gen: v7x
topology: tpu7x:2x2x1
jax: 0.10.0
libtpu: 0.0.40
codegen_flags: <defaults>
</compile_context>

<pallas_src>
import functools

import jax
import jax.numpy as jnp
from jax.experimental import pallas as pl
from jax.experimental.pallas import tpu as pltpu


def _round_up(x, m):
    return ((x + m - 1) // m) * m


# ----------------------------- Pallas kernels ------------------------------

def _gemm_bn_relu_kernel(a_ref, b_ref, o_ref, *, eps):
    # a: [M, K] bf16 patches, b: [K, Npad] bf16 weights (Npad multiple of 128).
    # GEMM on the MXU with f32 accumulation.
    acc = jnp.dot(a_ref[...], b_ref[...], preferred_element_type=jnp.float32)

    # BatchNorm2d (training mode): per-channel biased batch statistics over the
    # M = B*OH*OW rows.  Reductions pushed to the MXU via ones-vector matmuls.
    m_rows = acc.shape[0]
    inv_m = 1.0 / m_rows
    ones = jnp.ones((1, m_rows), jnp.float32)
    mean = jnp.dot(ones, acc, preferred_element_type=jnp.float32) * inv_m
    cent = acc - mean
    var = jnp.dot(ones, cent * cent, preferred_element_type=jnp.float32) * inv_m
    var = jnp.maximum(var, 0.0)

    y = cent * jax.lax.rsqrt(var + eps)       # affine: weight=1, bias=0 (default init)
    o_ref[...] = jnp.maximum(y, 0.0).astype(o_ref.dtype)


def _gemm_tanh_kernel(a_ref, b_ref, o_ref):
    acc = jnp.dot(a_ref[...], b_ref[...], preferred_element_type=jnp.float32)
    o_ref[...] = jnp.tanh(acc).astype(o_ref.dtype)


def fused_gemm_bn_relu(a, b, eps=1e-5):
    """a: [M, K] bf16, b: [K, Npad] bf16 -> bf16 [M, Npad] (BN+ReLU applied)."""
    M, K = a.shape
    K2, Npad = b.shape
    assert K == K2 and Npad % 128 == 0
    return pl.pallas_call(
        functools.partial(_gemm_bn_relu_kernel, eps=eps),
        out_shape=jax.ShapeDtypeStruct((M, Npad), jnp.bfloat16),
        grid=(1,),
        in_specs=[
            pl.BlockSpec((M, K), lambda i: (0, 0)),
            pl.BlockSpec((K, Npad), lambda i: (0, 0)),
        ],
        out_specs=pl.BlockSpec((M, Npad), lambda i: (0, 0)),
        compiler_params=pltpu.CompilerParams(
            dimension_semantics=("arbitrary",)),
    )(a, b)


def gemm_tanh(a, b, tm=256):
    """a: [M, K] bf16, b: [K, Npad] bf16 -> f32 [M, Npad] = tanh(a @ b).

    Row-tiled so the grid axis can be split across TensorCores (v7x megacore).
    """
    M, K = a.shape
    K2, Npad = b.shape
    assert K == K2 and Npad % 128 == 0
    if M <= tm or M % tm != 0:
        tm = M
    return pl.pallas_call(
        _gemm_tanh_kernel,
        out_shape=jax.ShapeDtypeStruct((M, Npad), jnp.float32),
        grid=(M // tm,),
        in_specs=[
            pl.BlockSpec((tm, K), lambda i: (i, 0)),
            pl.BlockSpec((K, Npad), lambda i: (0, 0)),
        ],
        out_specs=pl.BlockSpec((tm, Npad), lambda i: (i, 0)),
        compiler_params=pltpu.CompilerParams(
            dimension_semantics=("parallel",)),
    )(a, b)


# ------------------------------ JAX glue -----------------------------------

def im2col_deconv_nhwc(x, stride, padding, kH, kW):
    """ConvTranspose2d(bias=False) LHS as im2col patches, NHWC input.

    x: [B, H, W, Cin]
    Returns (patches [B*OH*OW, kH*kW*Cin], (B, OH, OW)).
    """
    B, H, W, Cin = x.shape
    OH = (H - 1) * stride - 2 * padding + kH
    OW = (W - 1) * stride - 2 * padding + kW

    # Dilate the input spatially by `stride` (insert zeros between pixels).
    if stride > 1:
        xd = jnp.zeros((B, (H - 1) * stride + 1, (W - 1) * stride + 1, Cin), x.dtype)
        xd = xd.at[:, ::stride, ::stride, :].set(x)
    else:
        xd = x

    # Pad by (k - 1 - padding) on each spatial side.
    ph, pw = kH - 1 - padding, kW - 1 - padding
    xp = jnp.pad(xd, ((0, 0), (ph, ph), (pw, pw), (0, 0)))

    # im2col: patches[b, oh, ow, (i*kW + j), c] = xp[b, oh+i, ow+j, c]
    cols = []
    for i in range(kH):
        for j in range(kW):
            cols.append(xp[:, i:i + OH, j:j + OW, :])
    patches = jnp.stack(cols, axis=3)                  # [B, OH, OW, kH*kW, Cin]
    return patches.reshape(B * OH * OW, kH * kW * Cin), (B, OH, OW)


def prep_deconv_weight(w, n_pad):
    """PyTorch ConvTranspose2d weight [Cin, Cout, kH, kW] -> GEMM RHS
    [kH*kW*Cin, n_pad] (spatially flipped, zero-padded on Cout, bf16)."""
    Cin, Cout, kH, kW = w.shape
    wf = w[:, :, ::-1, ::-1]                           # spatial flip
    w2 = wf.transpose(2, 3, 0, 1).reshape(kH * kW * Cin, Cout)
    w2 = jnp.pad(w2, ((0, 0), (0, n_pad - Cout)))
    return w2.astype(jnp.bfloat16)


def init_generator_params(config, key):
    """Deterministic weight init (DCGAN-style N(0, 0.02)). bias=False everywhere."""
    params = []
    in_ch = config["in_channels"]
    depths = config["layer_depth"]
    ks = config["layer_kernel_size"]
    n = len(depths)
    for i in range(n - 1):
        key, sub = jax.random.split(key)
        params.append(
            0.02 * jax.random.normal(sub, (in_ch, depths[i], ks[i], ks[i]), jnp.float32)
        )
        in_ch = depths[i]
    key, sub = jax.random.split(key)
    params.append(
        0.02 * jax.random.normal(
            sub, (in_ch, config["out_channels"], ks[n - 1], ks[n - 1]), jnp.float32
        )
    )
    return params


def generator_forward(x, params, config):
    """Forward pass matching Generator.forward. x: [B, Cin, H, W] (NCHW)."""
    strides = config["layer_stride"]
    pads = config["layer_padding"]
    n = len(config["layer_depth"])

    # Single layout change at the boundary; stay NHWC internally.
    h = jnp.transpose(x, (0, 2, 3, 1))                 # [B, H, W, Cin]

    # (ConvTranspose2d -> BatchNorm2d -> ReLU) * (n-1): one fused Pallas call each.
    for i in range(n - 1):
        w = params[i]
        _, Cout, kH, kW = w.shape
        n_pad = _round_up(Cout, 128)
        patches, (B, OH, OW) = im2col_deconv_nhwc(h, strides[i], pads[i], kH, kW)
        w2 = prep_deconv_weight(w, n_pad)
        y = fused_gemm_bn_relu(patches.astype(jnp.bfloat16), w2)   # [M, n_pad] bf16
        h = y[:, :Cout].reshape(B, OH, OW, Cout)

    # Final ConvTranspose2d -> Tanh (tanh fused into the GEMM kernel).
    w = params[n - 1]
    _, Cout, kH, kW = w.shape
    n_pad = _round_up(Cout, 128)
    patches, (B, OH, OW) = im2col_deconv_nhwc(h, strides[n - 1], pads[n - 1], kH, kW)
    w2 = prep_deconv_weight(w, n_pad)
    y = gemm_tanh(patches.astype(jnp.bfloat16), w2)                # [M, n_pad] f32
    y = y[:, :Cout].reshape(B, OH, OW, Cout)
    return jnp.transpose(y, (0, 3, 1, 2))              # back to NCHW


# --------------------------------- main -------------------------------------

if __name__ == "__main__":
    # TODO(synk): BatchNorm running-mean/var buffers are not tracked (they do
    # not affect the training-mode forward output).
    config = {
        "in_channels": 16,
        "out_channels": 3,
        "layer_depth": [32, 16, 8],          # num_layers = 3 (last entry unused, as in the module)
        "layer_kernel_size": [4, 4, 4],
        "layer_stride": [1, 2, 2],
        "layer_padding": [0, 1, 1],
    }

    key = jax.random.PRNGKey(0)
    key, pkey, zkey = jax.random.split(key, 3)
    params = init_generator_params(config, pkey)

    # Latent input, NCHW: (B=2, Cin=16, 1, 1)  ->  output (2, 3, 16, 16)
    z = jax.random.normal(zkey, (2, config["in_channels"], 1, 1), jnp.float32)

    out = generator_forward(z, params, config)
    out = jax.block_until_ready(out)

    assert out.shape == (2, 3, 16, 16), out.shape
    assert bool(jnp.all(jnp.isfinite(out)))
    assert bool(jnp.all(jnp.abs(out) <= 1.0))  # tanh output range
    print("KERNEL_OK")
</pallas_src>

<mosaic_0001>
module attributes {stable_mosaic.version = 11 : i64} {
  func.func @_gemm_bn_relu_kernel(%arg0: i32, %arg1: memref<32x256xbf16, #tpu.memory_space<vmem>>, %arg2: memref<256x128xbf16, #tpu.memory_space<vmem>>, %arg3: memref<32x128xbf16, #tpu.memory_space<vmem>>) attributes {dimension_semantics = [#tpu.dimension_semantics<arbitrary>], iteration_bounds = array<i64: 1>, scalar_prefetch = 0 : i64, scratch_operands = 0 : i64, tpu.core_type = #tpu.core_type<tc>, window_params = [{pipeline_mode = #tpu.pipeline_mode<synchronous>, transform_indices = @transform_0, window_bounds = array<i64: 32, 256>}, {pipeline_mode = #tpu.pipeline_mode<synchronous>, transform_indices = @transform_1, window_bounds = array<i64: 256, 128>}, {pipeline_mode = #tpu.pipeline_mode<synchronous>, transform_indices = @transform_2, window_bounds = array<i64: 32, 128>}]} {
    %c0 = arith.constant 0 : index
    %c0_0 = arith.constant 0 : index
    %0 = vector.load %arg1[%c0, %c0_0] : memref<32x256xbf16, #tpu.memory_space<vmem>>, vector<32x256xbf16>
    %c0_1 = arith.constant 0 : index
    %c0_2 = arith.constant 0 : index
    %1 = vector.load %arg2[%c0_1, %c0_2] : memref<256x128xbf16, #tpu.memory_space<vmem>>, vector<256x128xbf16>
    %cst = arith.constant dense<0.000000e+00> : vector<32x128xf32>
    %2 = tpu.matmul %0, %1, %cst {dimension_numbers = #tpu.dot_dimension_numbers<[1], [0], [0], [1], [0, 0, 1, 1], [], []>} : vector<32x256xbf16>, vector<256x128xbf16>, vector<32x128xf32> -> vector<32x128xf32>
    %cst_3 = arith.constant 1.000000e+00 : f32
    %3 = vector.broadcast %cst_3 : f32 to vector<1x32xf32>
    %cst_4 = arith.constant dense<0.000000e+00> : vector<1x128xf32>
    %4 = tpu.matmul %3, %2, %cst_4 {dimension_numbers = #tpu.dot_dimension_numbers<[1], [0], [0], [1], [0, 0, 1, 1], [], []>} : vector<1x32xf32>, vector<32x128xf32>, vector<1x128xf32> -> vector<1x128xf32>
    %cst_5 = arith.constant 3.125000e-02 : f32
    %5 = vector.broadcast %cst_5 : f32 to vector<1x128xf32>
    %6 = arith.mulf %4, %5 : vector<1x128xf32>
    %7 = vector.broadcast %6 : vector<1x128xf32> to vector<32x128xf32>
    %8 = arith.subf %2, %7 : vector<32x128xf32>
    %9 = arith.mulf %8, %8 : vector<32x128xf32>
    %cst_6 = arith.constant dense<0.000000e+00> : vector<1x128xf32>
    %10 = tpu.matmul %3, %9, %cst_6 {dimension_numbers = #tpu.dot_dimension_numbers<[1], [0], [0], [1], [0, 0, 1, 1], [], []>} : vector<1x32xf32>, vector<32x128xf32>, vector<1x128xf32> -> vector<1x128xf32>
    %cst_7 = arith.constant 3.125000e-02 : f32
    %11 = vector.broadcast %cst_7 : f32 to vector<1x128xf32>
    %12 = arith.mulf %10, %11 : vector<1x128xf32>
    %cst_8 = arith.constant 0.000000e+00 : f32
    %13 = vector.broadcast %cst_8 : f32 to vector<1x128xf32>
    %14 = arith.maximumf %12, %13 : vector<1x128xf32>
    %cst_9 = arith.constant 9.99999974E-6 : f32
    %15 = vector.broadcast %cst_9 : f32 to vector<1x128xf32>
    %16 = arith.addf %14, %15 : vector<1x128xf32>
    %17 = math.rsqrt %16 : vector<1x128xf32>
    %18 = vector.broadcast %17 : vector<1x128xf32> to vector<32x128xf32>
    %19 = arith.mulf %8, %18 : vector<32x128xf32>
    %cst_10 = arith.constant 0.000000e+00 : f32
    %20 = vector.broadcast %cst_10 : f32 to vector<32x128xf32>
    %21 = arith.maximumf %19, %20 : vector<32x128xf32>
    %22 = arith.truncf %21 : vector<32x128xf32> to vector<32x128xbf16>
    %c0_11 = arith.constant 0 : index
    %c0_12 = arith.constant 0 : index
    %23 = vector.load %arg3[%c0_11, %c0_12] : memref<32x128xbf16, #tpu.memory_space<vmem>>, vector<32x128xbf16>
    tpu.vector_store %arg3[%c0_11, %c0_12], %22 {strides = array<i32>} : memref<32x128xbf16, #tpu.memory_space<vmem>>, vector<32x128xbf16>,
    return
  }
  func.func @transform_0(%arg0: i32) -> (i32, i32) {
    %c0_i32 = arith.constant 0 : i32
    %c0_i32_0 = arith.constant 0 : i32
    %c0_i32_1 = arith.constant 0 : i32
    return %c0_i32, %c0_i32_0 : i32, i32
  }
  func.func @transform_1(%arg0: i32) -> (i32, i32) {
    %c0_i32 = arith.constant 0 : i32
    %c0_i32_0 = arith.constant 0 : i32
    %c0_i32_1 = arith.constant 0 : i32
    return %c0_i32, %c0_i32_0 : i32, i32
  }
  func.func @transform_2(%arg0: i32) -> (i32, i32) {
    %c0_i32 = arith.constant 0 : i32
    %c0_i32_0 = arith.constant 0 : i32
    %c0_i32_1 = arith.constant 0 : i32
    return %c0_i32, %c0_i32_0 : i32, i32
  }
}

</mosaic_0001>

<llo_original>
// kernel: tpu_custom_call.1
$region0: #{tpu_custom_call.1}
  #allocation0 [shape = 'u32[]', space=smem, size = 0x4, offset = 0x4, fixed_abs, tag = 'smem constant byte address 0x4 - core index']
  #allocation1 [shape = 'u32[144,128]{1,0:T(1,128)}', space=vmem, size = 0x12000, scoped, tag = 'internal scratch']
  %s0 = inlined_call_operand.hbm [shape: bf16[32,256], index: 0, kind: input, shape index: {}]
  %s1 = inlined_call_operand.hbm [shape: bf16[256,128], index: 1, kind: input, shape index: {}]
  %s2 = inlined_call_operand.hbm [shape: bf16[32,128], index: 2, kind: output, shape index: {}]
  %s3 = sld [smem:[#allocation0]]
  $region26: #{tpu_custom_call.1} parent=0
    _
  %s5 = ssub.s32 1, %s3
  %s6 = scalar_select 0, %s5, %s3
  $region1: #{tpu_custom_call.1} parent=0
    #allocation2 [shape = 'u8[16384]{0}', space=vmem, size = 0x4000, scoped, tag = 'input window, operand 0, single buffered']
    #allocation3 [shape = 's32[1]{0}', space=sflag, size = 0x4, scoped, tag = 'scoped memory for tpu_custom_call.1']
    #allocation4 [shape = 's32[1]{0}', space=sflag, size = 0x4, scoped, tag = 'scoped memory for tpu_custom_call.1']
    #allocation5 [shape = 'u8[65536]{0}', space=vmem, size = 0x10000, scoped, tag = 'input window, operand 1, single buffered']
    #allocation6 [shape = 's32[1]{0}', space=sflag, size = 0x4, scoped, tag = 'scoped memory for tpu_custom_call.1']
    #allocation7 [shape = 'u8[8192]{0}', space=vmem, size = 0x2000, scoped, tag = 'output window, operand 0, single buffered']
    %7 = vsyncpa [#allocation3], 0
    %8 = vsyncpa [#allocation6], 0
    %9 = vsyncpa [#allocation4], 0
    // Predicated region
    $region2: #{tpu_custom_call.1} parent=1 // pred_check
      _
    $region3: #{tpu_custom_call.1} parent=1 // pred_check_branch
      %11 = sbr.rel (0) target = $region5
    $region4: #{tpu_custom_call.1} parent=1 // pred_region
      %s13 = ssub.s32 512, 512
      %14 = vsyncadd [#allocation3], %s13
      %s15 = sshll.u32 [#allocation2], 4
      %s16 = int_to_ptr.vmem [resolvable:$true] %s15
      %21 = dma.hbm_to_vmem [thread:$0]  %s0, 512, %s16, [#allocation3], 128, 128, 8
    $region5: #{tpu_custom_call.1} parent=1 // pred_fallthru
      _
    // Predicated region
    $region6: #{tpu_custom_call.1} parent=1 // pred_check
      _
    $region7: #{tpu_custom_call.1} parent=1 // pred_check_branch
      %23 = sbr.rel (0) target = $region9
    $region8: #{tpu_custom_call.1} parent=1 // pred_region
      %s25 = ssub.s32 2048, 2048
      %26 = vsyncadd [#allocation6], %s25
      %s27 = sshll.u32 [#allocation5], 4
      %s28 = int_to_ptr.vmem [resolvable:$true] %s27
      %33 = dma.hbm_to_vmem [thread:$0]  %s1, 2048, %s28, [#allocation6], 64, 64, 4
    $region9: #{tpu_custom_call.1} parent=1 // pred_fallthru
      _
    // Predicated region
    $region10: #{tpu_custom_call.1} parent=1 // pred_check
      _
    $region11: #{tpu_custom_call.1} parent=1 // pred_check_branch
      %35 = sbr.rel (0) target = $region13
    $region12: #{tpu_custom_call.1} parent=1 // pred_region
      %36 = dma.done [#allocation3], 512
    $region13: #{tpu_custom_call.1} parent=1 // pred_fallthru
      _
    // Predicated region
    $region14: #{tpu_custom_call.1} parent=1 // pred_check
      _
    $region15: #{tpu_custom_call.1} parent=1 // pred_check_branch
      %38 = sbr.rel (0) target = $region17
    $region16: #{tpu_custom_call.1} parent=1 // pred_region
      %39 = dma.done [#allocation6], 2048
    $region17: #{tpu_custom_call.1} parent=1 // pred_fallthru
      _
    %v41 = vld [vmem:[#allocation2] sm:$0xff]
    %v42 = vld [vmem:[#allocation2 + $0x8] sm:$0xff]
    %v43 = vld [vmem:[#allocation2 + $0x10] sm:$0xff]
    %v44 = vld [vmem:[#allocation2 + $0x18] sm:$0xff]
    %v45 = vld [vmem:[#allocation5] sm:$0xf]
    %v46 = vld [vmem:[#allocation5 + $0x4] sm:$0xf]
    %v47 = vld [vmem:[#allocation5 + $0x8] sm:$0xf]
    %v48 = vld [vmem:[#allocation5 + $0xc] sm:$0xf]
    %v49 = vld [vmem:[#allocation5 + $0x10] sm:$0xf]
    %v50 = vld [vmem:[#allocation5 + $0x14] sm:$0xf]
    %v51 = vld [vmem:[#allocation5 + $0x18] sm:$0xf]
    %v52 = vld [vmem:[#allocation5 + $0x1c] sm:$0xf]
    %v53 = vld [vmem:[#allocation5 + $0x20] sm:$0xf]
    %v54 = vld [vmem:[#allocation5 + $0x24] sm:$0xf]
    %v55 = vld [vmem:[#allocation5 + $0x28] sm:$0xf]
    %v56 = vld [vmem:[#allocation5 + $0x2c] sm:$0xf]
    %v57 = vld [vmem:[#allocation5 + $0x30] sm:$0xf]
    %v58 = vld [vmem:[#allocation5 + $0x34] sm:$0xf]
    %v59 = vld [vmem:[#allocation5 + $0x38] sm:$0xf]
    %v60 = vld [vmem:[#allocation5 + $0x3c] sm:$0xf]
    %v61 = vld [vmem:[#allocation5 + $0x40] sm:$0xf]
    %v62 = vld [vmem:[#allocation5 + $0x44] sm:$0xf]
    %v63 = vld [vmem:[#allocation5 + $0x48] sm:$0xf]
    %v64 = vld [vmem:[#allocation5 + $0x4c] sm:$0xf]
    %v65 = vld [vmem:[#allocation5 + $0x50] sm:$0xf]
    %v66 = vld [vmem:[#allocation5 + $0x54] sm:$0xf]
    %v67 = vld [vmem:[#allocation5 + $0x58] sm:$0xf]
    %v68 = vld [vmem:[#allocation5 + $0x5c] sm:$0xf]
    %v69 = vld [vmem:[#allocation5 + $0x60] sm:$0xf]
    %v70 = vld [vmem:[#allocation5 + $0x64] sm:$0xf]
    %v71 = vld [vmem:[#allocation5 + $0x68] sm:$0xf]
    %v72 = vld [vmem:[#allocation5 + $0x6c] sm:$0xf]
    %v73 = vld [vmem:[#allocation5 + $0x70] sm:$0xf]
    %v74 = vld [vmem:[#allocation5 + $0x74] sm:$0xf]
    %v75 = vld [vmem:[#allocation5 + $0x78] sm:$0xf]
    %v76 = vld [vmem:[#allocation5 + $0x7c] sm:$0xf]
    %v81 = vunpack.c.l.b16 %v41
    %v82 = vunpack.c.h.b16 %v41
    %v83 = vunpack.c.l.b16 %v42
    %v84 = vunpack.c.h.b16 %v42
    %v85 = vunpack.c.l.b16 %v43
    %v86 = vunpack.c.h.b16 %v43
    %v87 = vunpack.c.l.b16 %v44
    %v88 = vunpack.c.h.b16 %v44
    %v89 = vpack.c.b16 %v83, %v81
    %v90 = vpack.c.b16 %v84, %v82
    %v91 = vpack.c.b16 %v87, %v85
    %v92 = vpack.c.b16 %v88, %v86
    %v129 = vunpack.c.l.b16 %v45
    %v130 = vunpack.c.l.b16 %v46
    %v131 = vunpack.c.l.b16 %v47
    %v132 = vunpack.c.l.b16 %v48
    %v133 = vunpack.c.l.b16 %v49
    %v134 = vunpack.c.l.b16 %v50
    %v135 = vunpack.c.l.b16 %v51
    %v136 = vunpack.c.l.b16 %v52
    %v137 = vunpack.c.l.b16 %v53
    %v138 = vunpack.c.l.b16 %v54
    %v139 = vunpack.c.l.b16 %v55
    %v140 = vunpack.c.l.b16 %v56
    %v141 = vunpack.c.l.b16 %v57
    %v142 = vunpack.c.l.b16 %v58
    %v143 = vunpack.c.l.b16 %v59
    %v144 = vunpack.c.l.b16 %v60
    %v145 = vunpack.c.l.b16 %v61
    %v146 = vunpack.c.l.b16 %v62
    %v147 = vunpack.c.l.b16 %v63
    %v148 = vunpack.c.l.b16 %v64
    %v149 = vunpack.c.l.b16 %v65
    %v150 = vunpack.c.l.b16 %v66
    %v151 = vunpack.c.l.b16 %v67
    %v152 = vunpack.c.l.b16 %v68
    %v153 = vunpack.c.l.b16 %v69
    %v154 = vunpack.c.l.b16 %v70
    %v155 = vunpack.c.l.b16 %v71
    %v156 = vunpack.c.l.b16 %v72
    %v157 = vunpack.c.l.b16 %v73
    %v158 = vunpack.c.l.b16 %v74
    %v159 = vunpack.c.l.b16 %v75
    %v160 = vunpack.c.l.b16 %v76
    %v161 = vpack.c.b16 %v130, %v129
    %v162 = vpack.c.b16 %v132, %v131
    %v163 = vpack.c.b16 %v134, %v133
    %v164 = vpack.c.b16 %v136, %v135
    %v165 = vpack.c.b16 %v138, %v137
    %v166 = vpack.c.b16 %v140, %v139
    %v167 = vpack.c.b16 %v142, %v141
    %v168 = vpack.c.b16 %v144, %v143
    %v169 = vpack.c.b16 %v146, %v145
    %v170 = vpack.c.b16 %v148, %v147
    %v171 = vpack.c.b16 %v150, %v149
    %v172 = vpack.c.b16 %v152, %v151
    %v173 = vpack.c.b16 %v154, %v153
    %v174 = vpack.c.b16 %v156, %v155
    %v175 = vpack.c.b16 %v158, %v157
    %v176 = vpack.c.b16 %v160, %v159
    %193 = vmatprep.subr.bf16.mxu0 0
    %194 = vmatpush1.bf16.msra.mxu0 %v161
    %195 = vmatprep.subr.bf16.mxu0 0
    %196 = vmatpush1.bf16.msra.mxu0 %v162
    %197 = vmatprep.subr.bf16.mxu0 0
    %198 = vmatpush1.bf16.msra.mxu0 %v163
    %199 = vmatprep.subr.bf16.mxu0 0
    %200 = vmatpush1.bf16.msra.mxu0 %v164
    %201 = vmatprep.subr.bf16.mxu0 0
    %202 = vmatpush1.bf16.msra.mxu0 %v165
    %203 = vmatprep.subr.bf16.mxu0 0
    %204 = vmatpush1.bf16.msra.mxu0 %v166
    %205 = vmatprep.subr.bf16.mxu0 0
    %206 = vmatpush1.bf16.msra.mxu0 %v167
    %207 = vmatprep.subr.bf16.mxu0 0
    %208 = vmatpush1.bf16.msra.mxu0 %v168
    %209 = vmatprep.subr.bf16.mxu0 0
    %210 = vmatpush1.bf16.msra.mxu0 %v169
    %211 = vmatprep.subr.bf16.mxu0 0
    %212 = vmatpush1.bf16.msra.mxu0 %v170
    %213 = vmatprep.subr.bf16.mxu0 0
    %214 = vmatpush1.bf16.msra.mxu0 %v171
    %215 = vmatprep.subr.bf16.mxu0 0
    %216 = vmatpush1.bf16.msra.mxu0 %v172
    %217 = vmatprep.subr.bf16.mxu0 0
    %218 = vmatpush1.bf16.msra.mxu0 %v173
    %219 = vmatprep.subr.bf16.mxu0 0
    %220 = vmatpush1.bf16.msra.mxu0 %v174
    %221 = vmatprep.subr.bf16.mxu0 0
    %222 = vmatpush1.bf16.msra.mxu0 %v175
    %223 = vmatprep.subr.bf16.mxu0 0
    %224 = vmatpush1.bf16.msra.mxu0 %v176
    %225 = vmatprep.mubr.bf16.mxu0 %v90
    %226 = vmatmul.mubr.bf16.gmra.mrb[0].mxu0 %v89
    %v227 = vpop.f32.mrb[0].mxu0
    %v228 = vadd.f32 0.0, %v227
    %v229 = vpop.f32.mrb[0].mxu0
    %v230 = vpop.f32.mrb[0].mxu0
    %v231 = vadd.f32 0.0, %v230
    %v232 = vpop.f32.mrb[0].mxu0
    %233 = vmatprep.mubr.bf16.mxu0 %v92
    %234 = vmatmul.mubr.bf16.gmra.mrb[0].mxu0 %v91
    %v235 = vpop.f32.mrb[0].mxu0
    %v236 = vadd.f32 0.0, %v235
    %v237 = vpop.f32.mrb[0].mxu0
    %v238 = vpop.f32.mrb[0].mxu0
    %v239 = vadd.f32 0.0, %v238
    %v240 = vpop.f32.mrb[0].mxu0
    %241 = vdwg.mxu0
    %vm242 = vcmask 261120
    %v244 = vsel %vm242, 1.0, 0
    %246 = vmatprep.subr.mxu0 0.0
    %247 = vmatpush1.msra.mxu0 %v228
    %248 = vmatprep.subr.mxu0 0.0
    %249 = vmatpush1.msra.mxu0 %v231
    %250 = vmatprep.subr.mxu0 0.0
    %251 = vmatpush1.msra.mxu0 %v236
    %252 = vmatprep.subr.mxu0 0.0
    %253 = vmatpush1.msra.mxu0 %v239
    %254 = vmatprep.subr.mxu0 0.0
    %255 = vmatpush1.msra.mxu0 0.0
    %256 = vmatprep.subr.mxu0 0.0
    %257 = vmatpush1.msra.mxu0 0.0
    %258 = vmatprep.subr.mxu0 0.0
    %259 = vmatpush1.msra.mxu0 0.0
    %260 = vmatprep.subr.mxu0 0.0
    %261 = vmatpush1.msra.mxu0 0.0
    %262 = vmatprep.subr.mxu0 0.0
    %263 = vmatpush1.msra.mxu0 0.0
    %264 = vmatprep.subr.mxu0 0.0
    %265 = vmatpush1.msra.mxu0 0.0
    %266 = vmatprep.subr.mxu0 0.0
    %267 = vmatpush1.msra.mxu0 0.0
    %268 = vmatprep.subr.mxu0 0.0
    %269 = vmatpush1.msra.mxu0 0.0
    %270 = vmatprep.subr.mxu0 0.0
    %271 = vmatpush1.msra.mxu0 0.0
    %272 = vmatprep.subr.mxu0 0.0
    %273 = vmatpush1.msra.mxu0 0.0
    %274 = vmatprep.subr.mxu0 0.0
    %275 = vmatpush1.msra.mxu0 0.0
    %276 = vmatprep.subr.mxu0 0.0
    %277 = vmatpush1.msra.mxu0 0.0
    %278 = vmatprep.subr.mxu0 0.0
    %279 = vmatpush1.msra.mxu0 0.0
    %280 = vmatprep.subr.mxu0 0.0
    %281 = vmatpush1.msra.mxu0 0.0
    %282 = vmatprep.subr.mxu0 0.0
    %283 = vmatpush1.msra.mxu0 0.0
    %284 = vmatprep.subr.mxu0 0.0
    %285 = vmatpush1.msra.mxu0 0.0
    %286 = vmatprep.subr.mxu0 0.0
    %287 = vmatpush1.msra.mxu0 0.0
    %288 = vmatprep.subr.mxu0 0.0
    %289 = vmatpush1.msra.mxu0 0.0
    %290 = vmatprep.subr.mxu0 0.0
    %291 = vmatpush1.msra.mxu0 0.0
    %292 = vmatprep.subr.mxu0 0.0
    %293 = vmatpush1.msra.mxu0 0.0
    %294 = vmatprep.subr.mxu0 0.0
    %295 = vmatpush1.msra.mxu0 0.0
    %296 = vmatprep.subr.mxu0 0.0
    %297 = vmatpush1.msra.mxu0 0.0
    %298 = vmatprep.subr.mxu0 0.0
    %299 = vmatpush1.msra.mxu0 0.0
    %300 = vmatprep.subr.mxu0 0.0
    %301 = vmatpush1.msra.mxu0 0.0
    %302 = vmatprep.subr.mxu0 0.0
    %303 = vmatpush1.msra.mxu0 0.0
    %304 = vmatprep.subr.mxu0 0.0
    %305 = vmatpush1.msra.mxu0 0.0
    %306 = vmatprep.subr.mxu0 0.0
    %307 = vmatpush1.msra.mxu0 0.0
    %308 = vmatprep.subr.mxu0 0.0
    %309 = vmatpush1.msra.mxu0 0.0
    %310 = vmatprep.mubr.f32.mxu0 0.0
    %311 = vmatmul.mubr.f32.gmra.mrb[0].mxu0 %v244
    %v312 = vpop.f32.mrb[0].mxu0
    %v313 = vadd.f32 0.0, %v312
    %v314 = vpop.f32.mrb[0].mxu0
    %315 = vdwg.mxu0
    %v316 = vmul.f32 %v313, 0.03125
    %v317 = vlaneseq
    %v318 = vshrl.u32 %v317, 7
    %v319 = vsub.s32 0, %v318
    %v320 = vrot.slane %v316, %v319
    %v321 = vsub.f32 %v228, %v320
    %v322 = vsub.f32 %v231, %v320
    %v323 = vsub.f32 %v236, %v320
    %v324 = vsub.f32 %v239, %v320
    %v325 = vmul.f32 %v321, %v321
    %v326 = vmul.f32 %v322, %v322
    %v327 = vmul.f32 %v323, %v323
    %v328 = vmul.f32 %v324, %v324
    %329 = vmatprep.subr.mxu0 0.0
    %330 = vmatpush1.msra.mxu0 %v325
    %331 = vmatprep.subr.mxu0 0.0
    %332 = vmatpush1.msra.mxu0 %v326
    %333 = vmatprep.subr.mxu0 0.0
    %334 = vmatpush1.msra.mxu0 %v327
    %335 = vmatprep.subr.mxu0 0.0
    %336 = vmatpush1.msra.mxu0 %v328
    %337 = vmatprep.subr.mxu0 0.0
    %338 = vmatpush1.msra.mxu0 0.0
    %339 = vmatprep.subr.mxu0 0.0
    %340 = vmatpush1.msra.mxu0 0.0
    %341 = vmatprep.subr.mxu0 0.0
    %342 = vmatpush1.msra.mxu0 0.0
    %343 = vmatprep.subr.mxu0 0.0
    %344 = vmatpush1.msra.mxu0 0.0
    %345 = vmatprep.subr.mxu0 0.0
    %346 = vmatpush1.msra.mxu0 0.0
    %347 = vmatprep.subr.mxu0 0.0
    %348 = vmatpush1.msra.mxu0 0.0
    %349 = vmatprep.subr.mxu0 0.0
    %350 = vmatpush1.msra.mxu0 0.0
    %351 = vmatprep.subr.mxu0 0.0
    %352 = vmatpush1.msra.mxu0 0.0
    %353 = vmatprep.subr.mxu0 0.0
    %354 = vmatpush1.msra.mxu0 0.0
    %355 = vmatprep.subr.mxu0 0.0
    %356 = vmatpush1.msra.mxu0 0.0
    %357 = vmatprep.subr.mxu0 0.0
    %358 = vmatpush1.msra.mxu0 0.0
    %359 = vmatprep.subr.mxu0 0.0
    %360 = vmatpush1.msra.mxu0 0.0
    %361 = vmatprep.subr.mxu0 0.0
    %362 = vmatpush1.msra.mxu0 0.0
    %363 = vmatprep.subr.mxu0 0.0
    %364 = vmatpush1.msra.mxu0 0.0
    %365 = vmatprep.subr.mxu0 0.0
    %366 = vmatpush1.msra.mxu0 0.0
    %367 = vmatprep.subr.mxu0 0.0
    %368 = vmatpush1.msra.mxu0 0.0
    %369 = vmatprep.subr.mxu0 0.0
    %370 = vmatpush1.msra.mxu0 0.0
    %371 = vmatprep.subr.mxu0 0.0
    %372 = vmatpush1.msra.mxu0 0.0
    %373 = vmatprep.subr.mxu0 0.0
    %374 = vmatpush1.msra.mxu0 0.0
    %375 = vmatprep.subr.mxu0 0.0
    %376 = vmatpush1.msra.mxu0 0.0
    %377 = vmatprep.subr.mxu0 0.0
    %378 = vmatpush1.msra.mxu0 0.0
    %379 = vmatprep.subr.mxu0 0.0
    %380 = vmatpush1.msra.mxu0 0.0
    %381 = vmatprep.subr.mxu0 0.0
    %382 = vmatpush1.msra.mxu0 0.0
    %383 = vmatprep.subr.mxu0 0.0
    %384 = vmatpush1.msra.mxu0 0.0
    %385 = vmatprep.subr.mxu0 0.0
    %386 = vmatpush1.msra.mxu0 0.0
    %387 = vmatprep.subr.mxu0 0.0
    %388 = vmatpush1.msra.mxu0 0.0
    %389 = vmatprep.subr.mxu0 0.0
    %390 = vmatpush1.msra.mxu0 0.0
    %391 = vmatprep.subr.mxu0 0.0
    %392 = vmatpush1.msra.mxu0 0.0
    %393 = vmatprep.mubr.f32.mxu0 0.0
    %394 = vmatmul.mubr.f32.gmra.mrb[0].mxu0 %v244
    %v395 = vpop.f32.mrb[0].mxu0
    %v396 = vadd.f32 0.0, %v395
    %v397 = vpop.f32.mrb[0].mxu0
    %398 = vdwg.mxu0
    %v399 = vmul.f32 %v396, 0.03125
    %v400 = vmax.f32 %v399, 0.0
    %v401 = vadd.f32 %v400, 1e-05
    %v402 = vrsqrt.pop %v401
    %v403 = vlaneseq
    %v404 = vshrl.u32 %v403, 7
    %v405 = vsub.s32 0, %v404
    %v406 = vrot.slane %v402, %v405
    %v407 = vmul.f32 %v321, %v406
    %v408 = vmul.f32 %v322, %v406
    %v409 = vmul.f32 %v323, %v406
    %v410 = vmul.f32 %v324, %v406
    %v411 = vmax.f32 %v407, 0.0
    %v412 = vmax.f32 %v408, 0.0
    %v413 = vmax.f32 %v409, 0.0
    %v414 = vmax.f32 %v410, 0.0
    %v415 = vpack.c.bf16 %v412, %v411
    %v416 = vpack.c.bf16 %v414, %v413
    %v419 = vunpack.c.l.b16 %v415
    %v420 = vunpack.c.h.b16 %v415
    %v421 = vunpack.c.l.b16 %v416
    %v422 = vunpack.c.h.b16 %v416
    %v423 = vpack.c.b16 %v419, %v419
    %v424 = vpack.c.b16 %v420, %v420
    %v425 = vpack.c.b16 %v421, %v421
    %v426 = vpack.c.b16 %v422, %v422
    %431 = vst [vmem:[#allocation7] sm:$0xf] %v423
    %432 = vst [vmem:[#allocation7 + $0x4] sm:$0xf] %v424
    %433 = vst [vmem:[#allocation7 + $0x8] sm:$0xf] %v425
    %434 = vst [vmem:[#allocation7 + $0xc] sm:$0xf] %v426
    // Predicated region
    $region18: #{tpu_custom_call.1} parent=1 // pred_check
      _
    $region19: #{tpu_custom_call.1} parent=1 // pred_check_branch
      %436 = sbr.rel (0) target = $region21
    $region20: #{tpu_custom_call.1} parent=1 // pred_region
      %s438 = ssub.s32 256, 256
      %439 = vsyncadd [#allocation4], %s438
      %s440 = sshll.u32 [#allocation7], 4
      %s441 = int_to_ptr.vmem [resolvable:$true] %s440
      %446 = dma.vmem_to_hbm [thread:$0]  %s441, 256, %s2, [#allocation4], 64, 64, 4
    $region21: #{tpu_custom_call.1} parent=1 // pred_fallthru
      _
    // Predicated region
    $region22: #{tpu_custom_call.1} parent=1 // pred_check
      _
    $region23: #{tpu_custom_call.1} parent=1 // pred_check_branch
      %448 = sbr.rel (0) target = $region25
    $region24: #{tpu_custom_call.1} parent=1 // pred_region
      %449 = dma.done [#allocation4], 256
    $region25: #{tpu_custom_call.1} parent=1 // pred_fallthru
      _
    %450 = vsyncpa [#allocation3], 1
    %451 = vsyncpa [#allocation6], 1
    %452 = vsyncpa [#allocation4], 1

</llo_original>
